<compile_context>
chip_gen: v7x
topology: tpu7x:2x2x1
jax: 0.10.0
libtpu: 0.0.40
codegen_flags: <defaults>
</compile_context>

<pallas_src>
import functools

import jax
import jax.numpy as jnp
from jax.experimental import pallas as pl
from jax.experimental.pallas import tpu as pltpu

HIDDEN = 256


def _round_up(x, m):
    return ((x + m - 1) // m) * m


def value_net_kernel(x_ref, w1_ref, b1_ref, w2_ref, b2_ref, w3_ref, b3_ref, o_ref):
    # fc1: MXU matmul, bf16 operands (w1 is already bf16), f32 accumulate.
    h1 = jnp.dot(
        x_ref[...].astype(jnp.bfloat16),
        w1_ref[...],
        preferred_element_type=jnp.float32,
    )
    h1 = jnp.maximum(h1 + b1_ref[...], 0.0)

    # fc2: same bf16-in / f32-accumulate MXU path (w2 already bf16).
    h2 = jnp.dot(
        h1.astype(jnp.bfloat16),
        w2_ref[...],
        preferred_element_type=jnp.float32,
    )
    h2 = jnp.maximum(h2 + b2_ref[...], 0.0)

    # fc3 (out_features == 1): VPU multiply + lane reduction instead of an
    # N=1 MXU matmul.  w3_ref is a (1, HIDDEN) f32 row broadcast over the tile.
    v = jnp.sum(h2 * w3_ref[...], axis=-1)                      # (TILE_B,)
    row = jax.lax.broadcast_in_dim(v, (1, v.shape[0]), (1,))    # lane-dense (1, TILE_B)
    o_ref[...] = row + b3_ref[0, 0]                             # b3 scalar from SMEM


@functools.partial(jax.jit, static_argnames=("tile_b",))
def value_network_forward(x, params, tile_b=2048):
    """x: (B, state_dim) f32.  Returns (B, 1) f32."""
    w1, b1, w2, b2, w3, b3 = params
    B, in_dim = x.shape
    hidden = w1.shape[1]

    # Batch tile: multiple of 128 so the lane-dense (1, TILE_B) output block is
    # legal; large so per-grid-step fixed cost (~0.35 us) is amortized.
    tb = min(_round_up(tile_b, 128), _round_up(B, 128))
    # Keep >= 2 grid steps when the batch allows it so the "parallel" axis can
    # shard across both TensorCores on v7x (harmless on single-TC v5e/v6e).
    if B >= 256 and pl.cdiv(B, tb) < 2:
        tb = _round_up(pl.cdiv(B, 2), 128)
    grid_b = pl.cdiv(B, tb)
    b_pad = grid_b * tb

    out_row = pl.pallas_call(
        value_net_kernel,
        out_shape=jax.ShapeDtypeStruct((1, b_pad), jnp.float32),
        grid=(grid_b,),
        in_specs=[
            pl.BlockSpec((tb, in_dim), lambda i: (i, 0)),        # x tile (pipelined; last block may be partial)
            pl.BlockSpec((in_dim, hidden), lambda i: (0, 0)),    # w1 bf16 (VMEM-resident, DMA'd once)
            pl.BlockSpec((1, hidden), lambda i: (0, 0)),         # b1
            pl.BlockSpec((hidden, hidden), lambda i: (0, 0)),    # w2 bf16
            pl.BlockSpec((1, hidden), lambda i: (0, 0)),         # b2
            pl.BlockSpec((1, hidden), lambda i: (0, 0)),         # w3 row (f32)
            pl.BlockSpec(memory_space=pltpu.MemorySpace.SMEM),   # b3 scalar
        ],
        out_specs=pl.BlockSpec((1, tb), lambda i: (0, i)),       # lane-dense output row
        compiler_params=pltpu.CompilerParams(
            dimension_semantics=("parallel",),
            vmem_limit_bytes=32 * 1024 * 1024,
        ),
    )(x, w1, b1, w2, b2, w3, b3)

    # Lane-dense (1, b_pad) -> (B, 1) column expected by the module.  Rows past
    # B (from the partial last block) are garbage and sliced off here.
    return out_row[0, :B].reshape(B, 1)


def init_params(key, state_dim, hidden=HIDDEN):
    """PyTorch-default Linear init U(-1/sqrt(fan_in), 1/sqrt(fan_in)).

    Layout / dtype choices for the kernel:
      w1: (state_dim, hidden) bf16   (MXU operand, stored pre-cast)
      w2: (hidden, hidden)    bf16
      w3: (1, hidden)         f32    (fc3 weight stored transposed, VPU path)
      b1/b2: (1, hidden) f32, b3: (1, 1) f32
    """
    def uniform(k, shape, fan_in):
        bound = 1.0 / jnp.sqrt(jnp.float32(fan_in))
        return jax.random.uniform(k, shape, jnp.float32, -bound, bound)

    k1w, k1b, k2w, k2b, k3w, k3b = jax.random.split(key, 6)
    w1 = uniform(k1w, (state_dim, hidden), state_dim).astype(jnp.bfloat16)
    b1 = uniform(k1b, (1, hidden), state_dim)
    w2 = uniform(k2w, (hidden, hidden), hidden).astype(jnp.bfloat16)
    b2 = uniform(k2b, (1, hidden), hidden)
    w3 = uniform(k3w, (1, hidden), hidden)
    b3 = uniform(k3b, (1, 1), hidden)
    return (w1, b1, w2, b2, w3, b3)


def reference_forward(x, params):
    """Pure-JAX reference with the same bf16-operand / f32-accumulate math."""
    w1, b1, w2, b2, w3, b3 = params
    h1 = jnp.maximum(
        jnp.dot(x.astype(jnp.bfloat16), w1, preferred_element_type=jnp.float32) + b1,
        0.0)
    h2 = jnp.maximum(
        jnp.dot(h1.astype(jnp.bfloat16), w2, preferred_element_type=jnp.float32) + b2,
        0.0)
    return jnp.sum(h2 * w3, axis=-1, keepdims=True) + b3[0, 0]


if __name__ == "__main__":
    # HalfCheetah-v5 observation space has 17 dims; small demo batch.
    state_dim = 17
    batch = 8

    key = jax.random.PRNGKey(0)
    k_params, k_x = jax.random.split(key)
    params = init_params(k_params, state_dim)
    x = jax.random.normal(k_x, (batch, state_dim), jnp.float32)

    out = value_network_forward(x, params)
    out = jax.block_until_ready(out)

    ref = reference_forward(x, params)
    assert out.shape == (batch, 1), out.shape
    assert jnp.allclose(out, ref, atol=1e-2, rtol=1e-2), (out, ref)

    print("KERNEL_OK")
</pallas_src>

<mosaic_0001>
module attributes {stable_mosaic.version = 11 : i64} {
  func.func @value_net_kernel(%arg0: i32, %arg1: memref<128x17xf32, #tpu.memory_space<vmem>>, %arg2: memref<17x256xbf16, #tpu.memory_space<vmem>>, %arg3: memref<1x256xf32, #tpu.memory_space<vmem>>, %arg4: memref<256x256xbf16, #tpu.memory_space<vmem>>, %arg5: memref<1x256xf32, #tpu.memory_space<vmem>>, %arg6: memref<1x256xf32, #tpu.memory_space<vmem>>, %arg7: memref<1x1xf32, #tpu.memory_space<smem>>, %arg8: memref<1x128xf32, #tpu.memory_space<vmem>>) attributes {dimension_semantics = [#tpu.dimension_semantics<parallel>], iteration_bounds = array<i64: 1>, scalar_prefetch = 0 : i64, scratch_operands = 0 : i64, tpu.core_type = #tpu.core_type<tc>, window_params = [{transform_indices = @transform_0, window_bounds = array<i64: 128, 17>}, {pipeline_mode = #tpu.pipeline_mode<synchronous>, transform_indices = @transform_1, window_bounds = array<i64: 17, 256>}, {pipeline_mode = #tpu.pipeline_mode<synchronous>, transform_indices = @transform_2, window_bounds = array<i64: 1, 256>}, {pipeline_mode = #tpu.pipeline_mode<synchronous>, transform_indices = @transform_3, window_bounds = array<i64: 256, 256>}, {pipeline_mode = #tpu.pipeline_mode<synchronous>, transform_indices = @transform_4, window_bounds = array<i64: 1, 256>}, {pipeline_mode = #tpu.pipeline_mode<synchronous>, transform_indices = @transform_5, window_bounds = array<i64: 1, 256>}, {transform_indices = @transform_6, window_bounds = array<i64: 1, 1>}, {transform_indices = @transform_7, window_bounds = array<i64: 1, 128>}]} {
    %c0 = arith.constant 0 : index
    %c0_0 = arith.constant 0 : index
    %0 = vector.load %arg1[%c0, %c0_0] : memref<128x17xf32, #tpu.memory_space<vmem>>, vector<128x17xf32>
    %1 = arith.truncf %0 : vector<128x17xf32> to vector<128x17xbf16>
    %c0_1 = arith.constant 0 : index
    %c0_2 = arith.constant 0 : index
    %2 = vector.load %arg2[%c0_1, %c0_2] : memref<17x256xbf16, #tpu.memory_space<vmem>>, vector<17x256xbf16>
    %cst = arith.constant dense<0.000000e+00> : vector<128x256xf32>
    %3 = tpu.matmul %1, %2, %cst {dimension_numbers = #tpu.dot_dimension_numbers<[1], [0], [0], [1], [0, 0, 1, 1], [], []>} : vector<128x17xbf16>, vector<17x256xbf16>, vector<128x256xf32> -> vector<128x256xf32>
    %c0_3 = arith.constant 0 : index
    %c0_4 = arith.constant 0 : index
    %4 = vector.load %arg3[%c0_3, %c0_4] : memref<1x256xf32, #tpu.memory_space<vmem>>, vector<1x256xf32>
    %5 = vector.broadcast %4 : vector<1x256xf32> to vector<128x256xf32>
    %6 = arith.addf %3, %5 : vector<128x256xf32>
    %cst_5 = arith.constant 0.000000e+00 : f32
    %7 = vector.broadcast %cst_5 : f32 to vector<128x256xf32>
    %8 = arith.maximumf %6, %7 : vector<128x256xf32>
    %9 = arith.truncf %8 : vector<128x256xf32> to vector<128x256xbf16>
    %c0_6 = arith.constant 0 : index
    %c0_7 = arith.constant 0 : index
    %10 = vector.load %arg4[%c0_6, %c0_7] : memref<256x256xbf16, #tpu.memory_space<vmem>>, vector<256x256xbf16>
    %cst_8 = arith.constant dense<0.000000e+00> : vector<128x256xf32>
    %11 = tpu.matmul %9, %10, %cst_8 {dimension_numbers = #tpu.dot_dimension_numbers<[1], [0], [0], [1], [0, 0, 1, 1], [], []>} : vector<128x256xbf16>, vector<256x256xbf16>, vector<128x256xf32> -> vector<128x256xf32>
    %c0_9 = arith.constant 0 : index
    %c0_10 = arith.constant 0 : index
    %12 = vector.load %arg5[%c0_9, %c0_10] : memref<1x256xf32, #tpu.memory_space<vmem>>, vector<1x256xf32>
    %13 = vector.broadcast %12 : vector<1x256xf32> to vector<128x256xf32>
    %14 = arith.addf %11, %13 : vector<128x256xf32>
    %cst_11 = arith.constant 0.000000e+00 : f32
    %15 = vector.broadcast %cst_11 : f32 to vector<128x256xf32>
    %16 = arith.maximumf %14, %15 : vector<128x256xf32>
    %c0_12 = arith.constant 0 : index
    %c0_13 = arith.constant 0 : index
    %17 = vector.load %arg6[%c0_12, %c0_13] : memref<1x256xf32, #tpu.memory_space<vmem>>, vector<1x256xf32>
    %18 = vector.broadcast %17 : vector<1x256xf32> to vector<128x256xf32>
    %19 = arith.mulf %16, %18 : vector<128x256xf32>
    %cst_14 = arith.constant dense<0.000000e+00> : vector<128xf32>
    %20 = vector.multi_reduction <add>, %19, %cst_14 [1] : vector<128x256xf32> to vector<128xf32>
    %21 = vector.shape_cast %20 : vector<128xf32> to vector<1x128xf32>
    %c0_15 = arith.constant 0 : index
    %c0_16 = arith.constant 0 : index
    %22 = memref.load %arg7[%c0_15, %c0_16] : memref<1x1xf32, #tpu.memory_space<smem>>
    %23 = vector.broadcast %22 : f32 to vector<1x128xf32>
    %24 = arith.addf %21, %23 : vector<1x128xf32>
    %c0_17 = arith.constant 0 : index
    %c0_18 = arith.constant 0 : index
    %25 = vector.load %arg8[%c0_17, %c0_18] : memref<1x128xf32, #tpu.memory_space<vmem>>, vector<1x128xf32>
    tpu.vector_store %arg8[%c0_17, %c0_18], %24 {strides = array<i32>} : memref<1x128xf32, #tpu.memory_space<vmem>>, vector<1x128xf32>,
    return
  }
  func.func @transform_0(%arg0: i32) -> (i32, i32) {
    %c0_i32 = arith.constant 0 : i32
    %c0_i32_0 = arith.constant 0 : i32
    return %arg0, %c0_i32 : i32, i32
  }
  func.func @transform_1(%arg0: i32) -> (i32, i32) {
    %c0_i32 = arith.constant 0 : i32
    %c0_i32_0 = arith.constant 0 : i32
    %c0_i32_1 = arith.constant 0 : i32
    return %c0_i32, %c0_i32_0 : i32, i32
  }
  func.func @transform_2(%arg0: i32) -> (i32, i32) {
    %c0_i32 = arith.constant 0 : i32
    %c0_i32_0 = arith.constant 0 : i32
    %c0_i32_1 = arith.constant 0 : i32
    return %c0_i32, %c0_i32_0 : i32, i32
  }
  func.func @transform_3(%arg0: i32) -> (i32, i32) {
    %c0_i32 = arith.constant 0 : i32
    %c0_i32_0 = arith.constant 0 : i32
    %c0_i32_1 = arith.constant 0 : i32
    return %c0_i32, %c0_i32_0 : i32, i32
  }
  func.func @transform_4(%arg0: i32) -> (i32, i32) {
    %c0_i32 = arith.constant 0 : i32
    %c0_i32_0 = arith.constant 0 : i32
    %c0_i32_1 = arith.constant 0 : i32
    return %c0_i32, %c0_i32_0 : i32, i32
  }
  func.func @transform_5(%arg0: i32) -> (i32, i32) {
    %c0_i32 = arith.constant 0 : i32
    %c0_i32_0 = arith.constant 0 : i32
    %c0_i32_1 = arith.constant 0 : i32
    return %c0_i32, %c0_i32_0 : i32, i32
  }
  func.func @transform_6(%arg0: i32) -> (i32, i32) {
    %c0_i32 = arith.constant 0 : i32
    %c0_i32_0 = arith.constant 0 : i32
    %c0_i32_1 = arith.constant 0 : i32
    return %c0_i32, %c0_i32_0 : i32, i32
  }
  func.func @transform_7(%arg0: i32) -> (i32, i32) {
    %c0_i32 = arith.constant 0 : i32
    %c0_i32_0 = arith.constant 0 : i32
    return %c0_i32, %arg0 : i32, i32
  }
}

</mosaic_0001>

<llo_original>
// kernel: value_network_forward.1
$region0: #{value_network_forward.1}
  #allocation0 [shape = 'u32[]', space=smem, size = 0x4, offset = 0x4, fixed_abs, tag = 'smem constant byte address 0x4 - core index']
  #allocation1 [shape = 'u32[144,128]{1,0:T(1,128)}', space=vmem, size = 0x12000, scoped, tag = 'internal scratch']
  #allocation2 [shape = 'f32[1,1]{1,0:T(1,128)S(6)}', space=smem, size = 0x200, scoped, tag = 'scoped memory for value_network_forward.1']
  %s0 = inlined_call_operand.hbm [shape: f32[8,17], index: 0, kind: input, shape index: {}]
  %s1 = inlined_call_operand.hbm [shape: bf16[17,256], index: 1, kind: input, shape index: {}]
  %s2 = inlined_call_operand.vmem [shape: f32[1,256], index: 2, kind: input, shape index: {}]
  %s3 = inlined_call_operand.hbm [shape: bf16[256,256], index: 3, kind: input, shape index: {}]
  %s4 = inlined_call_operand.vmem [shape: f32[1,256], index: 4, kind: input, shape index: {}]
  %s5 = inlined_call_operand.vmem [shape: f32[1,256], index: 5, kind: input, shape index: {}]
  %s6 = inlined_call_operand.<no memory space> [shape: f32[1,1], index: 6, kind: input, shape index: {}]
  %s7 = inlined_call_operand.vmem [shape: f32[1,128], index: 7, kind: output, shape index: {}]
  %s8 = sld [smem:[#allocation0]]
  $region50: #{value_network_forward.1} parent=0
    _
  %s10 = ssub.s32 1, %s8
  %s11 = scalar_select 0, %s10, %s8
  %12 = sst [smem:[#allocation2]] %s6
  $region1: #{value_network_forward.1} parent=0
    #allocation3 [shape = 'u8[65536]{0}', space=vmem, size = 0x10000, scoped, tag = 'input window, operand 0, single buffered']
    #allocation4 [shape = 's32[1]{0}', space=sflag, size = 0x4, scoped, tag = 'scoped memory for value_network_forward.1']
    #allocation5 [shape = 'u8[12288]{0}', space=vmem, size = 0x3000, scoped, tag = 'input window, operand 1, single buffered']
    #allocation6 [shape = 's32[1]{0}', space=sflag, size = 0x4, scoped, tag = 'scoped memory for value_network_forward.1']
    #allocation7 [shape = 'u8[131072]{0}', space=vmem, size = 0x20000, scoped, tag = 'input window, operand 3, single buffered']
    %13 = vsyncpa [#allocation4], 0
    %14 = vsyncpa [#allocation6], 0
    // Predicated region
    $region2: #{value_network_forward.1} parent=1 // pred_check
      _
    $region3: #{value_network_forward.1} parent=1 // pred_check_branch
      %16 = sbr.rel (0) target = $region5
    $region4: #{value_network_forward.1} parent=1 // pred_region
      %s18 = ssub.s32 2048, 128
      %19 = vsyncadd [#allocation4], %s18
      %s20 = sshll.u32 [#allocation3], 4
      %s21 = int_to_ptr.vmem [resolvable:$true] %s20
      %26 = dma.hbm_to_vmem [thread:$0]  %s0, 128, %s21, [#allocation4], 128, 128, 8
    $region5: #{value_network_forward.1} parent=1 // pred_fallthru
      _
    // Predicated region
    $region6: #{value_network_forward.1} parent=1 // pred_check
      _
    $region7: #{value_network_forward.1} parent=1 // pred_check_branch
      %28 = sbr.rel (0) target = $region9
    $region8: #{value_network_forward.1} parent=1 // pred_region
      %s30 = ssub.s32 384, 384
      %31 = vsyncadd [#allocation6], %s30
      %s32 = sshll.u32 [#allocation5], 4
      %s33 = int_to_ptr.vmem [resolvable:$true] %s32
      %38 = dma.hbm_to_vmem [thread:$0]  %s1, 384, %s33, [#allocation6], 128, 128, 8
    $region9: #{value_network_forward.1} parent=1 // pred_fallthru
      _
    // Predicated region
    $region10: #{value_network_forward.1} parent=1 // pred_check
      _
    $region11: #{value_network_forward.1} parent=1 // pred_check_branch
      %40 = sbr.rel (0) target = $region13
    $region12: #{value_network_forward.1} parent=1 // pred_region
      _
    $region13: #{value_network_forward.1} parent=1 // pred_fallthru
      _
    // Predicated region
    $region14: #{value_network_forward.1} parent=1 // pred_check
      _
    $region15: #{value_network_forward.1} parent=1 // pred_check_branch
      %42 = sbr.rel (0) target = $region17
    $region16: #{value_network_forward.1} parent=1 // pred_region
      %s44 = ssub.s32 4096, 4096
      %45 = vsyncadd [#allocation6], %s44
      %s46 = sshll.u32 [#allocation7], 4
      %s47 = int_to_ptr.vmem [resolvable:$true] %s46
      %52 = dma.hbm_to_vmem [thread:$0]  %s3, 4096, %s47, [#allocation6], 128, 128, 8
    $region17: #{value_network_forward.1} parent=1 // pred_fallthru
      _
    // Predicated region
    $region18: #{value_network_forward.1} parent=1 // pred_check
      _
    $region19: #{value_network_forward.1} parent=1 // pred_check_branch
      %54 = sbr.rel (0) target = $region21
    $region20: #{value_network_forward.1} parent=1 // pred_region
      _
    $region21: #{value_network_forward.1} parent=1 // pred_fallthru
      _
    // Predicated region
    $region22: #{value_network_forward.1} parent=1 // pred_check
      _
    $region23: #{value_network_forward.1} parent=1 // pred_check_branch
      %56 = sbr.rel (0) target = $region25
    $region24: #{value_network_forward.1} parent=1 // pred_region
      _
    $region25: #{value_network_forward.1} parent=1 // pred_fallthru
      _
    // Predicated region
    $region26: #{value_network_forward.1} parent=1 // pred_check
      _
    $region27: #{value_network_forward.1} parent=1 // pred_check_branch
      %58 = sbr.rel (0) target = $region29
    $region28: #{value_network_forward.1} parent=1 // pred_region
      _
    $region29: #{value_network_forward.1} parent=1 // pred_fallthru
      _
    // Predicated region
    $region30: #{value_network_forward.1} parent=1 // pred_check
      _
    $region31: #{value_network_forward.1} parent=1 // pred_check_branch
      %60 = sbr.rel (0) target = $region33
    $region32: #{value_network_forward.1} parent=1 // pred_region
      %61 = dma.done [#allocation4], 2048
    $region33: #{value_network_forward.1} parent=1 // pred_fallthru
      _
    // Predicated region
    $region34: #{value_network_forward.1} parent=1 // pred_check
      _
    $region35: #{value_network_forward.1} parent=1 // pred_check_branch
      %63 = sbr.rel (0) target = $region37
    $region36: #{value_network_forward.1} parent=1 // pred_region
      %64 = dma.done [#allocation6], 384
    $region37: #{value_network_forward.1} parent=1 // pred_fallthru
      _
    // Predicated region
    $region38: #{value_network_forward.1} parent=1 // pred_check
      _
    $region39: #{value_network_forward.1} parent=1 // pred_check_branch
      %66 = sbr.rel (0) target = $region41
    $region40: #{value_network_forward.1} parent=1 // pred_region
      %67 = dma.done [#allocation6], 4096
    $region41: #{value_network_forward.1} parent=1 // pred_fallthru
      _
    %v69 = vld [vmem:[#allocation3] sm:$0xff]
    %v70 = vld [vmem:[#allocation3 + $0x8] sm:$0xff]
    %v71 = vld [vmem:[#allocation3 + $0x10] sm:$0xff]
    %v72 = vld [vmem:[#allocation3 + $0x18] sm:$0xff]
    %v73 = vld [vmem:[#allocation3 + $0x20] sm:$0xff]
    %v74 = vld [vmem:[#allocation3 + $0x28] sm:$0xff]
    %v75 = vld [vmem:[#allocation3 + $0x30] sm:$0xff]
    %v76 = vld [vmem:[#allocation3 + $0x38] sm:$0xff]
    %v77 = vld [vmem:[#allocation3 + $0x40] sm:$0xff]
    %v78 = vld [vmem:[#allocation3 + $0x48] sm:$0xff]
    %v79 = vld [vmem:[#allocation3 + $0x50] sm:$0xff]
    %v80 = vld [vmem:[#allocation3 + $0x58] sm:$0xff]
    %v81 = vld [vmem:[#allocation3 + $0x60] sm:$0xff]
    %v82 = vld [vmem:[#allocation3 + $0x68] sm:$0xff]
    %v83 = vld [vmem:[#allocation3 + $0x70] sm:$0xff]
    %v84 = vld [vmem:[#allocation3 + $0x78] sm:$0xff]
    %v85 = vpack.c.bf16 %v70, %v69
    %v86 = vpack.c.bf16 %v72, %v71
    %v87 = vpack.c.bf16 %v74, %v73
    %v88 = vpack.c.bf16 %v76, %v75
    %v89 = vpack.c.bf16 %v78, %v77
    %v90 = vpack.c.bf16 %v80, %v79
    %v91 = vpack.c.bf16 %v82, %v81
    %v92 = vpack.c.bf16 %v84, %v83
    %v93 = vld [vmem:[#allocation5] sm:$0xff]
    %v94 = vld [vmem:[#allocation5 + $0x8] sm:$0xff]
    %v95 = vld [vmem:[#allocation5 + $0x10] sm:$0x11]
    %v96 = vld [vmem:[%s2] sm:$0x3]
    %v98 = vlaneseq
    %v99 = vshrl.u32 %v98, 7
    %v100 = vsub.s32 0, %v99
    %v101 = vrot.slane %v96, %v100
    %v102 = vlaneseq
    %v103 = vshrl.u32 %v102, 7
    %v104 = vsub.s32 1, %v103
    %v105 = vrot.slane %v96, %v104
    %v111 = vunpack.c.l.b16 %v93
    %v112 = vunpack.c.h.b16 %v93
    %v113 = vunpack.c.l.b16 %v94
    %v114 = vunpack.c.h.b16 %v94
    %v115 = vunpack.c.l.b16 %v95
    %v116 = vunpack.c.h.b16 %v95
    %v117 = vpack.c.b16 %v113, %v111
    %v118 = vpack.c.b16 %v114, %v112
    %v119 = vpack.c.b16 %v115, %v115
    %v120 = vpack.c.b16 %v116, %v116
    %vm123 = vcmask 138240
    %v125 = vsel %vm123, %v85, 0
    %v128 = vsel %vm123, %v86, 0
    %v131 = vsel %vm123, %v87, 0
    %v134 = vsel %vm123, %v88, 0
    %v137 = vsel %vm123, %v89, 0
    %v140 = vsel %vm123, %v90, 0
    %v143 = vsel %vm123, %v91, 0
    %v146 = vsel %vm123, %v92, 0
    %vm148 = vcmask 1040384
    %v149 = vsel 0, 4294967295, 65535
    %v150 = vsel %vm148, %v149, 0
    %v152 = vand.u32 %v119, %v150
    %v155 = vand.u32 %v120, %v150
    %157 = vmatprep.subr.bf16.mxu0 %v118
    %158 = vmatpush1.bf16.msra.mxu0 %v117
    %159 = vmatprep.subr.bf16.mxu0 %v155
    %160 = vmatpush1.bf16.msra.mxu0 %v152
    %161 = vmatprep.subr.bf16.mxu0 0
    %162 = vmatpush1.bf16.msra.mxu0 0
    %163 = vmatprep.subr.bf16.mxu0 0
    %164 = vmatpush1.bf16.msra.mxu0 0
    %165 = vmatprep.subr.bf16.mxu0 0
    %166 = vmatpush1.bf16.msra.mxu0 0
    %167 = vmatprep.subr.bf16.mxu0 0
    %168 = vmatpush1.bf16.msra.mxu0 0
    %169 = vmatprep.subr.bf16.mxu0 0
    %170 = vmatpush1.bf16.msra.mxu0 0
    %171 = vmatprep.subr.bf16.mxu0 0
    %172 = vmatpush1.bf16.msra.mxu0 0
    %173 = vmatprep.subr.bf16.mxu0 0
    %174 = vmatpush1.bf16.msra.mxu0 0
    %175 = vmatprep.subr.bf16.mxu0 0
    %176 = vmatpush1.bf16.msra.mxu0 0
    %177 = vmatprep.subr.bf16.mxu0 0
    %178 = vmatpush1.bf16.msra.mxu0 0
    %179 = vmatprep.subr.bf16.mxu0 0
    %180 = vmatpush1.bf16.msra.mxu0 0
    %181 = vmatprep.subr.bf16.mxu0 0
    %182 = vmatpush1.bf16.msra.mxu0 0
    %183 = vmatprep.subr.bf16.mxu0 0
    %184 = vmatpush1.bf16.msra.mxu0 0
    %185 = vmatprep.subr.bf16.mxu0 0
    %186 = vmatpush1.bf16.msra.mxu0 0
    %187 = vmatprep.subr.bf16.mxu0 0
    %188 = vmatpush1.bf16.msra.mxu0 0
    %189 = vmatprep.mubr.bf16.mxu0 0
    %190 = vmatmul.mubr.bf16.gmra.mrb[0].mxu0 %v125
    %v191 = vpop.f32.mrb[0].mxu0
    %v192 = vadd.f32 %v101, %v191
    %v193 = vpop.f32.mrb[0].mxu0
    %v194 = vadd.f32 %v105, %v193
    %v195 = vpop.f32.mrb[0].mxu0
    %v196 = vadd.f32 %v101, %v195
    %v197 = vpop.f32.mrb[0].mxu0
    %v198 = vadd.f32 %v105, %v197
    %199 = vmatprep.mubr.bf16.mxu0 0
    %200 = vmatmul.mubr.bf16.gmra.mrb[0].mxu0 %v128
    %v201 = vpop.f32.mrb[0].mxu0
    %v202 = vadd.f32 %v101, %v201
    %v203 = vpop.f32.mrb[0].mxu0
    %v204 = vadd.f32 %v105, %v203
    %v205 = vpop.f32.mrb[0].mxu0
    %v206 = vadd.f32 %v101, %v205
    %v207 = vpop.f32.mrb[0].mxu0
    %v208 = vadd.f32 %v105, %v207
    %209 = vmatprep.mubr.bf16.mxu0 0
    %210 = vmatmul.mubr.bf16.gmra.mrb[0].mxu0 %v131
    %v211 = vpop.f32.mrb[0].mxu0
    %v212 = vadd.f32 %v101, %v211
    %v213 = vpop.f32.mrb[0].mxu0
    %v214 = vadd.f32 %v105, %v213
    %v215 = vpop.f32.mrb[0].mxu0
    %v216 = vadd.f32 %v101, %v215
    %v217 = vpop.f32.mrb[0].mxu0
    %v218 = vadd.f32 %v105, %v217
    %219 = vmatprep.mubr.bf16.mxu0 0
    %220 = vmatmul.mubr.bf16.gmra.mrb[0].mxu0 %v134
    %v221 = vpop.f32.mrb[0].mxu0
    %v222 = vadd.f32 %v101, %v221
    %v223 = vpop.f32.mrb[0].mxu0
    %v224 = vadd.f32 %v105, %v223
    %v225 = vpop.f32.mrb[0].mxu0
    %v226 = vadd.f32 %v101, %v225
    %v227 = vpop.f32.mrb[0].mxu0
    %v228 = vadd.f32 %v105, %v227
    %229 = vmatprep.mubr.bf16.mxu0 0
    %230 = vmatmul.mubr.bf16.gmra.mrb[0].mxu0 %v137
    %v231 = vpop.f32.mrb[0].mxu0
    %v232 = vadd.f32 %v101, %v231
    %v233 = vpop.f32.mrb[0].mxu0
    %v234 = vadd.f32 %v105, %v233
    %v235 = vpop.f32.mrb[0].mxu0
    %v236 = vadd.f32 %v101, %v235
    %v237 = vpop.f32.mrb[0].mxu0
    %v238 = vadd.f32 %v105, %v237
    %239 = vmatprep.mubr.bf16.mxu0 0
    %240 = vmatmul.mubr.bf16.gmra.mrb[0].mxu0 %v140
    %v241 = vpop.f32.mrb[0].mxu0
    %v242 = vadd.f32 %v101, %v241
    %v243 = vpop.f32.mrb[0].mxu0
    %v244 = vadd.f32 %v105, %v243
    %v245 = vpop.f32.mrb[0].mxu0
    %v246 = vadd.f32 %v101, %v245
    %v247 = vpop.f32.mrb[0].mxu0
    %v248 = vadd.f32 %v105, %v247
    %249 = vmatprep.mubr.bf16.mxu0 0
    %250 = vmatmul.mubr.bf16.gmra.mrb[0].mxu0 %v143
    %v251 = vpop.f32.mrb[0].mxu0
    %v252 = vadd.f32 %v101, %v251
    %v253 = vpop.f32.mrb[0].mxu0
    %v254 = vadd.f32 %v105, %v253
    %v255 = vpop.f32.mrb[0].mxu0
    %v256 = vadd.f32 %v101, %v255
    %v257 = vpop.f32.mrb[0].mxu0
    %v258 = vadd.f32 %v105, %v257
    %259 = vmatprep.mubr.bf16.mxu0 0
    %260 = vmatmul.mubr.bf16.gmra.mrb[0].mxu0 %v146
    %v261 = vpop.f32.mrb[0].mxu0
    %v262 = vadd.f32 %v101, %v261
    %v263 = vpop.f32.mrb[0].mxu0
    %v264 = vadd.f32 %v105, %v263
    %v265 = vpop.f32.mrb[0].mxu0
    %v266 = vadd.f32 %v101, %v265
    %v267 = vpop.f32.mrb[0].mxu0
    %v268 = vadd.f32 %v105, %v267
    %269 = vdwg.mxu0
    %v270 = vmax.f32 %v192, 0.0
    %v271 = vmax.f32 %v194, 0.0
    %v272 = vmax.f32 %v196, 0.0
    %v273 = vmax.f32 %v198, 0.0
    %v274 = vmax.f32 %v202, 0.0
    %v275 = vmax.f32 %v204, 0.0
    %v276 = vmax.f32 %v206, 0.0
    %v277 = vmax.f32 %v208, 0.0
    %v278 = vmax.f32 %v212, 0.0
    %v279 = vmax.f32 %v214, 0.0
    %v280 = vmax.f32 %v216, 0.0
    %v281 = vmax.f32 %v218, 0.0
    %v282 = vmax.f32 %v222, 0.0
    %v283 = vmax.f32 %v224, 0.0
    %v284 = vmax.f32 %v226, 0.0
    %v285 = vmax.f32 %v228, 0.0
    %v286 = vmax.f32 %v232, 0.0
    %v287 = vmax.f32 %v234, 0.0
    %v288 = vmax.f32 %v236, 0.0
    %v289 = vmax.f32 %v238, 0.0
    %v290 = vmax.f32 %v242, 0.0
    %v291 = vmax.f32 %v244, 0.0
    %v292 = vmax.f32 %v246, 0.0
    %v293 = vmax.f32 %v248, 0.0
    %v294 = vmax.f32 %v252, 0.0
    %v295 = vmax.f32 %v254, 0.0
    %v296 = vmax.f32 %v256, 0.0
    %v297 = vmax.f32 %v258, 0.0
    %v298 = vmax.f32 %v262, 0.0
    %v299 = vmax.f32 %v264, 0.0
    %v300 = vmax.f32 %v266, 0.0
    %v301 = vmax.f32 %v268, 0.0
    %v302 = vpack.c.bf16 %v272, %v270
    %v303 = vpack.c.bf16 %v273, %v271
    %v304 = vpack.c.bf16 %v276, %v274
    %v305 = vpack.c.bf16 %v277, %v275
    %v306 = vpack.c.bf16 %v280, %v278
    %v307 = vpack.c.bf16 %v281, %v279
    %v308 = vpack.c.bf16 %v284, %v282
    %v309 = vpack.c.bf16 %v285, %v283
    %v310 = vpack.c.bf16 %v288, %v286
    %v311 = vpack.c.bf16 %v289, %v287
    %v312 = vpack.c.bf16 %v292, %v290
    %v313 = vpack.c.bf16 %v293, %v291
    %v314 = vpack.c.bf16 %v296, %v294
    %v315 = vpack.c.bf16 %v297, %v295
    %v316 = vpack.c.bf16 %v300, %v298
    %v317 = vpack.c.bf16 %v301, %v299
    %v318 = vld [vmem:[#allocation7] sm:$0xff]
    %v319 = vld [vmem:[#allocation7 + $0x8] sm:$0xff]
    %v320 = vld [vmem:[#allocation7 + $0x10] sm:$0xff]
    %v321 = vld [vmem:[#allocation7 + $0x18] sm:$0xff]
    %v322 = vld [vmem:[#allocation7 + $0x20] sm:$0xff]
    %v323 = vld [vmem:[#allocation7 + $0x28] sm:$0xff]
    %v324 = vld [vmem:[#allocation7 + $0x30] sm:$0xff]
    %v325 = vld [vmem:[#allocation7 + $0x38] sm:$0xff]
    %v326 = vld [vmem:[#allocation7 + $0x40] sm:$0xff]
    %v327 = vld [vmem:[#allocation7 + $0x48] sm:$0xff]
    %v328 = vld [vmem:[#allocation7 + $0x50] sm:$0xff]
    %v329 = vld [vmem:[#allocation7 + $0x58] sm:$0xff]
    %v330 = vld [vmem:[#allocation7 + $0x60] sm:$0xff]
    %v331 = vld [vmem:[#allocation7 + $0x68] sm:$0xff]
    %v332 = vld [vmem:[#allocation7 + $0x70] sm:$0xff]
    %v333 = vld [vmem:[#allocation7 + $0x78] sm:$0xff]
    %v334 = vld [vmem:[#allocation7 + $0x80] sm:$0xff]
    %v335 = vld [vmem:[#allocation7 + $0x88] sm:$0xff]
    %v336 = vld [vmem:[#allocation7 + $0x90] sm:$0xff]
    %v337 = vld [vmem:[#allocation7 + $0x98] sm:$0xff]
    %v338 = vld [vmem:[#allocation7 + $0xa0] sm:$0xff]
    %v339 = vld [vmem:[#allocation7 + $0xa8] sm:$0xff]
    %v340 = vld [vmem:[#allocation7 + $0xb0] sm:$0xff]
    %v341 = vld [vmem:[#allocation7 + $0xb8] sm:$0xff]
    %v342 = vld [vmem:[#allocation7 + $0xc0] sm:$0xff]
    %v343 = vld [vmem:[#allocation7 + $0xc8] sm:$0xff]
    %v344 = vld [vmem:[#allocation7 + $0xd0] sm:$0xff]
    %v345 = vld [vmem:[#allocation7 + $0xd8] sm:$0xff]
    %v346 = vld [vmem:[#allocation7 + $0xe0] sm:$0xff]
    %v347 = vld [vmem:[#allocation7 + $0xe8] sm:$0xff]
    %v348 = vld [vmem:[#allocation7 + $0xf0] sm:$0xff]
    %v349 = vld [vmem:[#allocation7 + $0xf8] sm:$0xff]
    %v350 = vld [vmem:[%s4] sm:$0x3]
    %v352 = vlaneseq
    %v353 = vshrl.u32 %v352, 7
    %v354 = vsub.s32 0, %v353
    %v355 = vrot.slane %v350, %v354
    %v356 = vlaneseq
    %v357 = vshrl.u32 %v356, 7
    %v358 = vsub.s32 1, %v357
    %v359 = vrot.slane %v350, %v358
    %v394 = vunpack.c.l.b16 %v318
    %v395 = vunpack.c.h.b16 %v318
    %v396 = vunpack.c.l.b16 %v319
    %v397 = vunpack.c.h.b16 %v319
    %v398 = vunpack.c.l.b16 %v320
    %v399 = vunpack.c.h.b16 %v320
    %v400 = vunpack.c.l.b16 %v321
    %v401 = vunpack.c.h.b16 %v321
    %v402 = vunpack.c.l.b16 %v322
    %v403 = vunpack.c.h.b16 %v322
    %v404 = vunpack.c.l.b16 %v323
    %v405 = vunpack.c.h.b16 %v323
    %v406 = vunpack.c.l.b16 %v324
    %v407 = vunpack.c.h.b16 %v324
    %v408 = vunpack.c.l.b16 %v325
    %v409 = vunpack.c.h.b16 %v325
    %v410 = vunpack.c.l.b16 %v326
    %v411 = vunpack.c.h.b16 %v326
    %v412 = vunpack.c.l.b16 %v327
    %v413 = vunpack.c.h.b16 %v327
    %v414 = vunpack.c.l.b16 %v328
    %v415 = vunpack.c.h.b16 %v328
    %v416 = vunpack.c.l.b16 %v329
    %v417 = vunpack.c.h.b16 %v329
    %v418 = vunpack.c.l.b16 %v330
    %v419 = vunpack.c.h.b16 %v330
    %v420 = vunpack.c.l.b16 %v331
    %v421 = vunpack.c.h.b16 %v331
    %v422 = vunpack.c.l.b16 %v332
    %v423 = vunpack.c.h.b16 %v332
    %v424 = vunpack.c.l.b16 %v333
    %v425 = vunpack.c.h.b16 %v333
    %v426 = vunpack.c.l.b16 %v334
    %v427 = vunpack.c.h.b16 %v334
    %v428 = vunpack.c.l.b16 %v335
    %v429 = vunpack.c.h.b16 %v335
    %v430 = vunpack.c.l.b16 %v336
    %v431 = vunpack.c.h.b16 %v336
    %v432 = vunpack.c.l.b16 %v337
    %v433 = vunpack.c.h.b16 %v337
    %v434 = vunpack.c.l.b16 %v338
    %v435 = vunpack.c.h.b16 %v338
    %v436 = vunpack.c.l.b16 %v339
    %v437 = vunpack.c.h.b16 %v339
    %v438 = vunpack.c.l.b16 %v340
    %v439 = vunpack.c.h.b16 %v340
    %v440 = vunpack.c.l.b16 %v341
    %v441 = vunpack.c.h.b16 %v341
    %v442 = vunpack.c.l.b16 %v342
    %v443 = vunpack.c.h.b16 %v342
    %v444 = vunpack.c.l.b16 %v343
    %v445 = vunpack.c.h.b16 %v343
    %v446 = vunpack.c.l.b16 %v344
    %v447 = vunpack.c.h.b16 %v344
    %v448 = vunpack.c.l.b16 %v345
    %v449 = vunpack.c.h.b16 %v345
    %v450 = vunpack.c.l.b16 %v346
    %v451 = vunpack.c.h.b16 %v346
    %v452 = vunpack.c.l.b16 %v347
    %v453 = vunpack.c.h.b16 %v347
    %v454 = vunpack.c.l.b16 %v348
    %v455 = vunpack.c.h.b16 %v348
    %v456 = vunpack.c.l.b16 %v349
    %v457 = vunpack.c.h.b16 %v349
    %v458 = vpack.c.b16 %v396, %v394
    %v459 = vpack.c.b16 %v397, %v395
    %v460 = vpack.c.b16 %v400, %v398
    %v461 = vpack.c.b16 %v401, %v399
    %v462 = vpack.c.b16 %v404, %v402
    %v463 = vpack.c.b16 %v405, %v403
    %v464 = vpack.c.b16 %v408, %v406
    %v465 = vpack.c.b16 %v409, %v407
    %v466 = vpack.c.b16 %v412, %v410
    %v467 = vpack.c.b16 %v413, %v411
    %v468 = vpack.c.b16 %v416, %v414
    %v469 = vpack.c.b16 %v417, %v415
    %v470 = vpack.c.b16 %v420, %v418
    %v471 = vpack.c.b16 %v421, %v419
    %v472 = vpack.c.b16 %v424, %v422
    %v473 = vpack.c.b16 %v425, %v423
    %v474 = vpack.c.b16 %v428, %v426
    %v475 = vpack.c.b16 %v429, %v427
    %v476 = vpack.c.b16 %v432, %v430
    %v477 = vpack.c.b16 %v433, %v431
    %v478 = vpack.c.b16 %v436, %v434
    %v479 = vpack.c.b16 %v437, %v435
    %v480 = vpack.c.b16 %v440, %v438
    %v481 = vpack.c.b16 %v441, %v439
    %v482 = vpack.c.b16 %v444, %v442
    %v483 = vpack.c.b16 %v445, %v443
    %v484 = vpack.c.b16 %v448, %v446
    %v485 = vpack.c.b16 %v449, %v447
    %v486 = vpack.c.b16 %v452, %v450
    %v487 = vpack.c.b16 %v453, %v451
    %v488 = vpack.c.b16 %v456, %v454
    %v489 = vpack.c.b16 %v457, %v455
    %522 = vmatprep.subr.bf16.mxu0 %v459
    %523 = vmatpush1.bf16.msra.mxu0 %v458
    %524 = vmatprep.subr.bf16.mxu0 %v461
    %525 = vmatpush1.bf16.msra.mxu0 %v460
    %526 = vmatprep.subr.bf16.mxu0 %v463
    %527 = vmatpush1.bf16.msra.mxu0 %v462
    %528 = vmatprep.subr.bf16.mxu0 %v465
    %529 = vmatpush1.bf16.msra.mxu0 %v464
    %530 = vmatprep.subr.bf16.mxu0 %v467
    %531 = vmatpush1.bf16.msra.mxu0 %v466
    %532 = vmatprep.subr.bf16.mxu0 %v469
    %533 = vmatpush1.bf16.msra.mxu0 %v468
    %534 = vmatprep.subr.bf16.mxu0 %v471
    %535 = vmatpush1.bf16.msra.mxu0 %v470
    %536 = vmatprep.subr.bf16.mxu0 %v473
    %537 = vmatpush1.bf16.msra.mxu0 %v472
    %538 = vmatprep.subr.bf16.mxu0 %v475
    %539 = vmatpush1.bf16.msra.mxu0 %v474
    %540 = vmatprep.subr.bf16.mxu0 %v477
    %541 = vmatpush1.bf16.msra.mxu0 %v476
    %542 = vmatprep.subr.bf16.mxu0 %v479
    %543 = vmatpush1.bf16.msra.mxu0 %v478
    %544 = vmatprep.subr.bf16.mxu0 %v481
    %545 = vmatpush1.bf16.msra.mxu0 %v480
    %546 = vmatprep.subr.bf16.mxu0 %v483
    %547 = vmatpush1.bf16.msra.mxu0 %v482
    %548 = vmatprep.subr.bf16.mxu0 %v485
    %549 = vmatpush1.bf16.msra.mxu0 %v484
    %550 = vmatprep.subr.bf16.mxu0 %v487
    %551 = vmatpush1.bf16.msra.mxu0 %v486
    %552 = vmatprep.subr.bf16.mxu0 %v489
    %553 = vmatpush1.bf16.msra.mxu0 %v488
    %554 = vmatprep.mubr.bf16.mxu0 %v303
    %555 = vmatmul.mubr.bf16.gmra.mrb[0].mxu0 %v302
    %v556 = vpop.f32.mrb[0].mxu0
    %v557 = vadd.f32 %v355, %v556
    %v558 = vpop.f32.mrb[0].mxu0
    %v559 = vadd.f32 %v359, %v558
    %v560 = vpop.f32.mrb[0].mxu0
    %v561 = vadd.f32 %v355, %v560
    %v562 = vpop.f32.mrb[0].mxu0
    %v563 = vadd.f32 %v359, %v562
    %564 = vmatprep.mubr.bf16.mxu0 %v305
    %565 = vmatmul.mubr.bf16.gmra.mrb[0].mxu0 %v304
    %v566 = vpop.f32.mrb[0].mxu0
    %v567 = vadd.f32 %v355, %v566
    %v568 = vpop.f32.mrb[0].mxu0
    %v569 = vadd.f32 %v359, %v568
    %v570 = vpop.f32.mrb[0].mxu0
    %v571 = vadd.f32 %v355, %v570
    %v572 = vpop.f32.mrb[0].mxu0
    %v573 = vadd.f32 %v359, %v572
    %574 = vmatprep.mubr.bf16.mxu0 %v307
    %575 = vmatmul.mubr.bf16.gmra.mrb[0].mxu0 %v306
    %v576 = vpop.f32.mrb[0].mxu0
    %v577 = vadd.f32 %v355, %v576
    %v578 = vpop.f32.mrb[0].mxu0
    %v579 = vadd.f32 %v359, %v578
    %v580 = vpop.f32.mrb[0].mxu0
    %v581 = vadd.f32 %v355, %v580
    %v582 = vpop.f32.mrb[0].mxu0
    %v583 = vadd.f32 %v359, %v582
    %584 = vmatprep.mubr.bf16.mxu0 %v309
    %585 = vmatmul.mubr.bf16.gmra.mrb[0].mxu0 %v308
    %v586 = vpop.f32.mrb[0].mxu0
    %v587 = vadd.f32 %v355, %v586
    %v588 = vpop.f32.mrb[0].mxu0
    %v589 = vadd.f32 %v359, %v588
    %v590 = vpop.f32.mrb[0].mxu0
    %v591 = vadd.f32 %v355, %v590
    %v592 = vpop.f32.mrb[0].mxu0
    %v593 = vadd.f32 %v359, %v592
    %594 = vmatprep.mubr.bf16.mxu0 %v311
    %595 = vmatmul.mubr.bf16.gmra.mrb[0].mxu0 %v310
    %v596 = vpop.f32.mrb[0].mxu0
    %v597 = vadd.f32 %v355, %v596
    %v598 = vpop.f32.mrb[0].mxu0
    %v599 = vadd.f32 %v359, %v598
    %v600 = vpop.f32.mrb[0].mxu0
    %v601 = vadd.f32 %v355, %v600
    %v602 = vpop.f32.mrb[0].mxu0
    %v603 = vadd.f32 %v359, %v602
    %604 = vmatprep.mubr.bf16.mxu0 %v313
    %605 = vmatmul.mubr.bf16.gmra.mrb[0].mxu0 %v312
    %v606 = vpop.f32.mrb[0].mxu0
    %v607 = vadd.f32 %v355, %v606
    %v608 = vpop.f32.mrb[0].mxu0
    %v609 = vadd.f32 %v359, %v608
    %v610 = vpop.f32.mrb[0].mxu0
    %v611 = vadd.f32 %v355, %v610
    %v612 = vpop.f32.mrb[0].mxu0
    %v613 = vadd.f32 %v359, %v612
    %614 = vmatprep.mubr.bf16.mxu0 %v315
    %615 = vmatmul.mubr.bf16.gmra.mrb[0].mxu0 %v314
    %v616 = vpop.f32.mrb[0].mxu0
    %v617 = vadd.f32 %v355, %v616
    %v618 = vpop.f32.mrb[0].mxu0
    %v619 = vadd.f32 %v359, %v618
    %v620 = vpop.f32.mrb[0].mxu0
    %v621 = vadd.f32 %v355, %v620
    %v622 = vpop.f32.mrb[0].mxu0
    %v623 = vadd.f32 %v359, %v622
    %624 = vmatprep.mubr.bf16.mxu0 %v317
    %625 = vmatmul.mubr.bf16.gmra.mrb[0].mxu0 %v316
    %v626 = vpop.f32.mrb[0].mxu0
    %v627 = vadd.f32 %v355, %v626
    %v628 = vpop.f32.mrb[0].mxu0
    %v629 = vadd.f32 %v359, %v628
    %v630 = vpop.f32.mrb[0].mxu0
    %v631 = vadd.f32 %v355, %v630
    %v632 = vpop.f32.mrb[0].mxu0
    %v633 = vadd.f32 %v359, %v632
    %634 = vdwg.mxu0
    %v635 = vmax.f32 %v557, 0.0
    %v636 = vmax.f32 %v559, 0.0
    %v637 = vmax.f32 %v561, 0.0
    %v638 = vmax.f32 %v563, 0.0
    %v639 = vmax.f32 %v567, 0.0
    %v640 = vmax.f32 %v569, 0.0
    %v641 = vmax.f32 %v571, 0.0
    %v642 = vmax.f32 %v573, 0.0
    %v643 = vmax.f32 %v577, 0.0
    %v644 = vmax.f32 %v579, 0.0
    %v645 = vmax.f32 %v581, 0.0
    %v646 = vmax.f32 %v583, 0.0
    %v647 = vmax.f32 %v587, 0.0
    %v648 = vmax.f32 %v589, 0.0
    %v649 = vmax.f32 %v591, 0.0
    %v650 = vmax.f32 %v593, 0.0
    %v651 = vmax.f32 %v597, 0.0
    %v652 = vmax.f32 %v599, 0.0
    %v653 = vmax.f32 %v601, 0.0
    %v654 = vmax.f32 %v603, 0.0
    %v655 = vmax.f32 %v607, 0.0
    %v656 = vmax.f32 %v609, 0.0
    %v657 = vmax.f32 %v611, 0.0
    %v658 = vmax.f32 %v613, 0.0
    %v659 = vmax.f32 %v617, 0.0
    %v660 = vmax.f32 %v619, 0.0
    %v661 = vmax.f32 %v621, 0.0
    %v662 = vmax.f32 %v623, 0.0
    %v663 = vmax.f32 %v627, 0.0
    %v664 = vmax.f32 %v629, 0.0
    %v665 = vmax.f32 %v631, 0.0
    %v666 = vmax.f32 %v633, 0.0
    %v667 = vld [vmem:[%s5] sm:$0x3]
    %v669 = vlaneseq
    %v670 = vshrl.u32 %v669, 7
    %v671 = vsub.s32 0, %v670
    %v672 = vrot.slane %v667, %v671
    %v673 = vlaneseq
    %v674 = vshrl.u32 %v673, 7
    %v675 = vsub.s32 1, %v674
    %v676 = vrot.slane %v667, %v675
    %v679 = vmul.f32 %v635, %v672
    %v680 = vmul.f32 %v636, %v676
    %v681 = vmul.f32 %v637, %v672
    %v682 = vmul.f32 %v638, %v676
    %v683 = vmul.f32 %v639, %v672
    %v684 = vmul.f32 %v640, %v676
    %v685 = vmul.f32 %v641, %v672
    %v686 = vmul.f32 %v642, %v676
    %v687 = vmul.f32 %v643, %v672
    %v688 = vmul.f32 %v644, %v676
    %v689 = vmul.f32 %v645, %v672
    %v690 = vmul.f32 %v646, %v676
    %v691 = vmul.f32 %v647, %v672
    %v692 = vmul.f32 %v648, %v676
    %v693 = vmul.f32 %v649, %v672
    %v694 = vmul.f32 %v650, %v676
    %v695 = vmul.f32 %v651, %v672
    %v696 = vmul.f32 %v652, %v676
    %v697 = vmul.f32 %v653, %v672
    %v698 = vmul.f32 %v654, %v676
    %v699 = vmul.f32 %v655, %v672
    %v700 = vmul.f32 %v656, %v676
    %v701 = vmul.f32 %v657, %v672
    %v702 = vmul.f32 %v658, %v676
    %v703 = vmul.f32 %v659, %v672
    %v704 = vmul.f32 %v660, %v676
    %v705 = vmul.f32 %v661, %v672
    %v706 = vmul.f32 %v662, %v676
    %v707 = vmul.f32 %v663, %v672
    %v708 = vmul.f32 %v664, %v676
    %v709 = vmul.f32 %v665, %v672
    %v710 = vmul.f32 %v666, %v676
    %v711 = vadd.f32 %v679, %v680
    %712 = vadd.xlane.f32.xlu0 %v711
    %v713 = vpop.xlane.xlu0 %712
    %v714 = vadd.f32 %v681, %v682
    %715 = vadd.xlane.f32.xlu0 %v714
    %v716 = vpop.xlane.xlu0 %715
    %v717 = vadd.f32 %v683, %v684
    %718 = vadd.xlane.f32.xlu0 %v717
    %v719 = vpop.xlane.xlu0 %718
    %v720 = vadd.f32 %v685, %v686
    %721 = vadd.xlane.f32.xlu0 %v720
    %v722 = vpop.xlane.xlu0 %721
    %v723 = vadd.f32 %v687, %v688
    %724 = vadd.xlane.f32.xlu0 %v723
    %v725 = vpop.xlane.xlu0 %724
    %v726 = vadd.f32 %v689, %v690
    %727 = vadd.xlane.f32.xlu0 %v726
    %v728 = vpop.xlane.xlu0 %727
    %v729 = vadd.f32 %v691, %v692
    %730 = vadd.xlane.f32.xlu0 %v729
    %v731 = vpop.xlane.xlu0 %730
    %v732 = vadd.f32 %v693, %v694
    %733 = vadd.xlane.f32.xlu0 %v732
    %v734 = vpop.xlane.xlu0 %733
    %v735 = vadd.f32 %v695, %v696
    %736 = vadd.xlane.f32.xlu0 %v735
    %v737 = vpop.xlane.xlu0 %736
    %v738 = vadd.f32 %v697, %v698
    %739 = vadd.xlane.f32.xlu0 %v738
    %v740 = vpop.xlane.xlu0 %739
    %v741 = vadd.f32 %v699, %v700
    %742 = vadd.xlane.f32.xlu0 %v741
    %v743 = vpop.xlane.xlu0 %742
    %v744 = vadd.f32 %v701, %v702
    %745 = vadd.xlane.f32.xlu0 %v744
    %v746 = vpop.xlane.xlu0 %745
    %v747 = vadd.f32 %v703, %v704
    %748 = vadd.xlane.f32.xlu0 %v747
    %v749 = vpop.xlane.xlu0 %748
    %v750 = vadd.f32 %v705, %v706
    %751 = vadd.xlane.f32.xlu0 %v750
    %v752 = vpop.xlane.xlu0 %751
    %v753 = vadd.f32 %v707, %v708
    %754 = vadd.xlane.f32.xlu0 %v753
    %v755 = vpop.xlane.xlu0 %754
    %v756 = vadd.f32 %v709, %v710
    %757 = vadd.xlane.f32.xlu0 %v756
    %v758 = vpop.xlane.xlu0 %757
    %s759 = sld [smem:[#allocation2]]
    %v760 = vstv %s759
    %v761 = vadd.f32 %v713, %v760
    %v762 = vadd.f32 %v716, %v760
    %v763 = vadd.f32 %v719, %v760
    %v764 = vadd.f32 %v722, %v760
    %v765 = vadd.f32 %v725, %v760
    %v766 = vadd.f32 %v728, %v760
    %v767 = vadd.f32 %v731, %v760
    %v768 = vadd.f32 %v734, %v760
    %v769 = vadd.f32 %v737, %v760
    %v770 = vadd.f32 %v740, %v760
    %v771 = vadd.f32 %v743, %v760
    %v772 = vadd.f32 %v746, %v760
    %v773 = vadd.f32 %v749, %v760
    %v774 = vadd.f32 %v752, %v760
    %v775 = vadd.f32 %v755, %v760
    %v776 = vadd.f32 %v758, %v760
    %v793 = vlaneseq
    %v794 = vand.u32 %v793, 127
    %v795 = vlaneseq
    %v796 = vshrl.u32 %v795, 7
    %v797 = vsub.s32 %v794, %v796
    %v798 = vrot.slane %v761, %v797
    %v799 = vadd.s32 %v794, 4294967288
    %v800 = vlaneseq
    %v801 = vshrl.u32 %v800, 7
    %v802 = vsub.s32 %v799, %v801
    %v803 = vrot.slane %v762, %v802
    %vm804 = vcmask 130112
    %v805 = vsel %vm804, %v803, %v798
    %v806 = vadd.s32 %v794, 4294967280
    %v807 = vlaneseq
    %v808 = vshrl.u32 %v807, 7
    %v809 = vsub.s32 %v806, %v808
    %v810 = vrot.slane %v763, %v809
    %vm811 = vcmask 195712
    %v812 = vsel %vm811, %v810, %v805
    %v813 = vadd.s32 %v794, 4294967272
    %v814 = vlaneseq
    %v815 = vshrl.u32 %v814, 7
    %v816 = vsub.s32 %v813, %v815
    %v817 = vrot.slane %v764, %v816
    %vm818 = vcmask 261312
    %v819 = vsel %vm818, %v817, %v812
    %v820 = vadd.s32 %v794, 4294967264
    %v821 = vlaneseq
    %v822 = vshrl.u32 %v821, 7
    %v823 = vsub.s32 %v820, %v822
    %v824 = vrot.slane %v765, %v823
    %vm825 = vcmask 326912
    %v826 = vsel %vm825, %v824, %v819
    %v827 = vadd.s32 %v794, 4294967256
    %v828 = vlaneseq
    %v829 = vshrl.u32 %v828, 7
    %v830 = vsub.s32 %v827, %v829
    %v831 = vrot.slane %v766, %v830
    %vm832 = vcmask 392512
    %v833 = vsel %vm832, %v831, %v826
    %v834 = vadd.s32 %v794, 4294967248
    %v835 = vlaneseq
    %v836 = vshrl.u32 %v835, 7
    %v837 = vsub.s32 %v834, %v836
    %v838 = vrot.slane %v767, %v837
    %vm839 = vcmask 458112
    %v840 = vsel %vm839, %v838, %v833
    %v841 = vadd.s32 %v794, 4294967240
    %v842 = vlaneseq
    %v843 = vshrl.u32 %v842, 7
    %v844 = vsub.s32 %v841, %v843
    %v845 = vrot.slane %v768, %v844
    %vm846 = vcmask 523712
    %v847 = vsel %vm846, %v845, %v840
    %v848 = vadd.s32 %v794, 4294967232
    %v849 = vlaneseq
    %v850 = vshrl.u32 %v849, 7
    %v851 = vsub.s32 %v848, %v850
    %v852 = vrot.slane %v769, %v851
    %vm853 = vcmask 589312
    %v854 = vsel %vm853, %v852, %v847
    %v855 = vadd.s32 %v794, 4294967224
    %v856 = vlaneseq
    %v857 = vshrl.u32 %v856, 7
    %v858 = vsub.s32 %v855, %v857
    %v859 = vrot.slane %v770, %v858
    %vm860 = vcmask 654912
    %v861 = vsel %vm860, %v859, %v854
    %v862 = vadd.s32 %v794, 4294967216
    %v863 = vlaneseq
    %v864 = vshrl.u32 %v863, 7
    %v865 = vsub.s32 %v862, %v864
    %v866 = vrot.slane %v771, %v865
    %vm867 = vcmask 720512
    %v868 = vsel %vm867, %v866, %v861
    %v869 = vadd.s32 %v794, 4294967208
    %v870 = vlaneseq
    %v871 = vshrl.u32 %v870, 7
    %v872 = vsub.s32 %v869, %v871
    %v873 = vrot.slane %v772, %v872
    %vm874 = vcmask 786112
    %v875 = vsel %vm874, %v873, %v868
    %v876 = vadd.s32 %v794, 4294967200
    %v877 = vlaneseq
    %v878 = vshrl.u32 %v877, 7
    %v879 = vsub.s32 %v876, %v878
    %v880 = vrot.slane %v773, %v879
    %vm881 = vcmask 851712
    %v882 = vsel %vm881, %v880, %v875
    %v883 = vadd.s32 %v794, 4294967192
    %v884 = vlaneseq
    %v885 = vshrl.u32 %v884, 7
    %v886 = vsub.s32 %v883, %v885
    %v887 = vrot.slane %v774, %v886
    %vm888 = vcmask 917312
    %v889 = vsel %vm888, %v887, %v882
    %v890 = vadd.s32 %v794, 4294967184
    %v891 = vlaneseq
    %v892 = vshrl.u32 %v891, 7
    %v893 = vsub.s32 %v890, %v892
    %v894 = vrot.slane %v775, %v893
    %vm895 = vcmask 982912
    %v896 = vsel %vm895, %v894, %v889
    %v897 = vadd.s32 %v794, 4294967176
    %v898 = vlaneseq
    %v899 = vshrl.u32 %v898, 7
    %v900 = vsub.s32 %v897, %v899
    %v901 = vrot.slane %v776, %v900
    %vm902 = vcmask 1048512
    %v903 = vsel %vm902, %v901, %v896
    %905 = vst [vmem:[%s7] sm:$0x1] %v903
    // Predicated region
    $region42: #{value_network_forward.1} parent=1 // pred_check
      _
    $region43: #{value_network_forward.1} parent=1 // pred_check_branch
      %907 = sbr.rel (0) target = $region45
    $region44: #{value_network_forward.1} parent=1 // pred_region
      _
    $region45: #{value_network_forward.1} parent=1 // pred_fallthru
      _
    // Predicated region
    $region46: #{value_network_forward.1} parent=1 // pred_check
      _
    $region47: #{value_network_forward.1} parent=1 // pred_check_branch
      %909 = sbr.rel (0) target = $region49
    $region48: #{value_network_forward.1} parent=1 // pred_region
      _
    $region49: #{value_network_forward.1} parent=1 // pred_fallthru
      _
    %910 = vsyncpa [#allocation4], 1
    %911 = vsyncpa [#allocation6], 1

</llo_original>
